<compile_context>
chip_gen: v5e
topology: v5e:2x2
jax: 0.10.0
libtpu: 0.0.40
codegen_flags: <defaults>
</compile_context>

<pallas_src>
import functools
import math

import jax
import jax.numpy as jnp
from jax.experimental import pallas as pl
from jax.experimental.pallas import tpu as pltpu


def _round_up(x, m):
    return ((x + m - 1) // m) * m


def _cdiv(a, b):
    return (a + b - 1) // b


def _vmem_budget_bytes():
    """Per-generation VMEM budget used for tile sizing and vmem_limit ceiling."""
    cap = 64 << 20  # conservative fallback = v7x per-TensorCore VMEM
    try:
        info = pltpu.get_tpu_info()
        cap = int(getattr(info, "vmem_capacity_bytes", cap))
    except Exception:
        pass
    # Leave headroom for Mosaic internal scratch:
    #   v7x (64 MiB)   -> ~48 MiB usable
    #   v5e/v6e (128M) -> ~96 MiB usable
    return min(int(cap * 3 // 4), 100 << 20)


def _proj_ln_kernel(p_ref, w_ref, prm_ref, o_ref, *, eps, e_valid):
    # p_ref:   (tile_m, K_pad)  im2col patch tile (compute dtype)
    # w_ref:   (K_pad, E_pad)   flattened conv weight, K order = (kh, kw, Cin)
    # prm_ref: (8, E_pad) f32   rows: 0 conv bias, 1 LN gamma, 2 LN beta,
    #                            3 valid-lane mask (1.0 where e < E else 0.0)
    # o_ref:   (tile_m, E_pad)
    acc = jnp.dot(p_ref[...], w_ref[...], preferred_element_type=jnp.float32)
    prm = prm_ref[...]
    bias = prm[0:1, :]
    gamma = prm[1:2, :]
    beta = prm[2:3, :]
    mask = prm[3:4, :]

    y = acc + bias                                  # padded E lanes stay exactly 0
    inv_e = 1.0 / float(e_valid)
    mean = jnp.sum(y, axis=-1, keepdims=True) * inv_e
    d = (y - mean) * mask                           # exact two-pass stats; mask kills pad lanes
    var = jnp.sum(d * d, axis=-1, keepdims=True) * inv_e
    scale = gamma * jax.lax.rsqrt(var + eps)        # folded LN affine (one epilogue pass)
    o_ref[...] = (d * scale + beta).astype(o_ref.dtype)


def overlap_patch_embed(x, weight, bias, gamma, beta, *, stride, eps=1e-5,
                        tile_m=1024, compute_dtype=jnp.bfloat16, out_dtype=None):
    """x: (B, Cin, H, W) NCHW. weight: (E, Cin, kh, kw).
    Returns (y, Ho, Wo) with y of shape (B, Ho*Wo, E) in out_dtype (default compute_dtype)."""
    B, Cin, H, W = x.shape
    E, _, kh, kw = weight.shape
    ph, pw = kh // 2, kw // 2
    Ho = (H + 2 * ph - kh) // stride + 1
    Wo = (W + 2 * pw - kw) // stride + 1
    N = Ho * Wo
    M = B * N
    K = Cin * kh * kw

    out_dtype = compute_dtype if out_dtype is None else out_dtype
    in_bytes = jnp.dtype(compute_dtype).itemsize
    out_bytes = jnp.dtype(out_dtype).itemsize

    # Lane/sublane-aligned padded sizes.
    K_pad = _round_up(K, 128)
    E_pad = _round_up(E, 128)
    row_align = 16 if in_bytes < 4 else 8           # bf16 packs 16 rows per vreg

    def _vmem_need(tm):
        return (2 * tm * K_pad * in_bytes           # double-buffered patch tile
                + K_pad * E_pad * in_bytes          # weight (single-buffered)
                + 8 * E_pad * 4                     # packed params (single-buffered)
                + 2 * tm * E_pad * out_bytes        # double-buffered output tile
                + 3 * tm * E_pad * 4)               # in-kernel f32 intermediates

    budget = _vmem_budget_bytes()

    def _shrink(tm):
        return max(row_align, _round_up(tm // 2, row_align))

    # Largest useful tile is one covering all of M.
    tile_m = max(row_align, min(_round_up(tile_m, row_align), _round_up(M, row_align)))
    while _vmem_need(tile_m) > budget:              # fit per-generation VMEM budget
        nt = _shrink(tile_m)
        if nt == tile_m:
            break
        tile_m = nt
    while _cdiv(M, tile_m) < 2:                     # keep >= 2 grid steps (v7x megacore)
        nt = _shrink(tile_m)
        if nt == tile_m:
            break
        tile_m = nt

    M_pad = _round_up(M, tile_m)

    # ---- im2col glue (plain JAX), channel-last so the big tensor needs no HBM
    # transpose; emitted directly in compute_dtype.
    # TODO(synk): fuse this gather into the Pallas kernel (overlapping Ho-row
    # input bands per grid step) so the (M, K) matrix is never written to HBM.
    x_nhwc = jnp.transpose(x, (0, 2, 3, 1)).astype(compute_dtype)   # input-sized, cheap
    x_pad = jnp.pad(x_nhwc, ((0, 0), (ph, ph), (pw, pw), (0, 0)))
    taps = []
    for i in range(kh):
        for j in range(kw):
            taps.append(
                x_pad[:, i:i + stride * Ho:stride, j:j + stride * Wo:stride, :]
            )  # (B, Ho, Wo, Cin)
    patches = jnp.stack(taps, axis=3)               # (B, Ho, Wo, kh*kw, Cin)
    patches = patches.reshape(M, K)                 # row-major flatten: no transpose
    patches = jnp.pad(patches, ((0, M_pad - M), (0, K_pad - K)))

    # (E, Cin, kh, kw) -> (kh, kw, Cin, E) -> (K, E): matches the patch K order.
    w_flat = jnp.transpose(weight, (2, 3, 1, 0)).reshape(K, E).astype(compute_dtype)
    w_flat = jnp.pad(w_flat, ((0, K_pad - K), (0, E_pad - E)))

    # Pack bias / gamma / beta / valid-lane mask into one lane-aligned f32 block.
    params = jnp.zeros((8, E_pad), jnp.float32)
    params = params.at[0, :E].set(bias.astype(jnp.float32))
    params = params.at[1, :E].set(gamma.astype(jnp.float32))
    params = params.at[2, :E].set(beta.astype(jnp.float32))
    params = params.at[3, :E].set(1.0)

    vmem_limit = int(min(max(_vmem_need(tile_m) + (8 << 20), 32 << 20), budget))

    def _call(single_buffer_consts):
        const_kwargs = (dict(pipeline_mode=pl.Buffered(1))
                        if single_buffer_consts else {})
        return pl.pallas_call(
            functools.partial(_proj_ln_kernel, eps=eps, e_valid=E),
            out_shape=jax.ShapeDtypeStruct((M_pad, E_pad), out_dtype),
            grid_spec=pltpu.PrefetchScalarGridSpec(
                num_scalar_prefetch=0,
                grid=(M_pad // tile_m,),
                in_specs=[
                    pl.BlockSpec((tile_m, K_pad), lambda m: (m, 0)),
                    pl.BlockSpec((K_pad, E_pad), lambda m: (0, 0), **const_kwargs),
                    pl.BlockSpec((8, E_pad), lambda m: (0, 0), **const_kwargs),
                ],
                out_specs=pl.BlockSpec((tile_m, E_pad), lambda m: (m, 0)),
            ),
            compiler_params=pltpu.CompilerParams(
                dimension_semantics=("parallel",),
                vmem_limit_bytes=vmem_limit,
            ),
        )(patches, w_flat, params)

    try:
        out = _call(True)
    except Exception:
        # pl.Buffered(1) unsupported on this jax version -> default double-buffering.
        out = _call(False)

    y = out[:M, :E].reshape(B, N, E)
    return y, Ho, Wo


def _reference(x, weight, bias, gamma, beta, *, stride, eps=1e-5):
    # pure-JAX reference matching the PyTorch forward (conv -> flatten -> LN)
    kh, kw = weight.shape[2], weight.shape[3]
    y = jax.lax.conv_general_dilated(
        x, weight,
        window_strides=(stride, stride),
        padding=[(kh // 2, kh // 2), (kw // 2, kw // 2)],
        dimension_numbers=("NCHW", "OIHW", "NCHW"),
    ) + bias[None, :, None, None]
    B, E, Ho, Wo = y.shape
    y = y.reshape(B, E, Ho * Wo).transpose(0, 2, 1)          # (B, N, E)
    mean = jnp.mean(y, axis=-1, keepdims=True)
    var = jnp.mean((y - mean) ** 2, axis=-1, keepdims=True)
    yn = (y - mean) / jnp.sqrt(var + eps)
    return yn * gamma + beta, Ho, Wo


if __name__ == "__main__":
    # Small shapes consistent with the module's forward.
    B, Cin, H, W = 2, 4, 16, 16
    patch_size, stride, embed_dim = 7, 4, 32

    key = jax.random.PRNGKey(0)
    kx, kw_ = jax.random.split(key)

    x = jax.random.normal(kx, (B, Cin, H, W), dtype=jnp.float32)

    # Conv2d init: normal(0, sqrt(2 / fan_out)), bias zeros (per _init_weights)
    fan_out = patch_size * patch_size * embed_dim
    weight = jax.random.normal(
        kw_, (embed_dim, Cin, patch_size, patch_size), dtype=jnp.float32
    ) * math.sqrt(2.0 / fan_out)
    bias = jnp.zeros((embed_dim,), dtype=jnp.float32)
    # LayerNorm init: weight=1, bias=0
    gamma = jnp.ones((embed_dim,), dtype=jnp.float32)
    beta = jnp.zeros((embed_dim,), dtype=jnp.float32)

    ref, Ho_r, Wo_r = _reference(x, weight, bias, gamma, beta, stride=stride)

    # f32 compute/output path — strict tolerance vs the conv+LN reference.
    out32, Ho, Wo = overlap_patch_embed(
        x, weight, bias, gamma, beta, stride=stride,
        compute_dtype=jnp.float32, out_dtype=jnp.float32)
    out32 = jax.block_until_ready(out32)
    assert (Ho, Wo) == (Ho_r, Wo_r)
    assert out32.shape == (B, Ho * Wo, embed_dim)
    if not jnp.allclose(out32, ref, atol=1e-4, rtol=1e-4):
        raise AssertionError("Pallas kernel (f32) output mismatch vs reference")

    # Default fast path: bf16 compute + bf16 output, f32 accumulate / LN stats.
    out16, Ho16, Wo16 = overlap_patch_embed(
        x, weight, bias, gamma, beta, stride=stride)
    out16 = jax.block_until_ready(out16)
    assert (Ho16, Wo16) == (Ho_r, Wo_r)
    assert out16.shape == (B, Ho * Wo, embed_dim)
    assert out16.dtype == jnp.bfloat16
    if not jnp.allclose(out16.astype(jnp.float32), ref, atol=5e-2, rtol=5e-2):
        raise AssertionError("Pallas kernel (bf16) output mismatch vs reference")

    print("KERNEL_OK")
</pallas_src>

<mosaic_0001>
module attributes {stable_mosaic.version = 11 : i64} {
  func.func @_proj_ln_kernel(%arg0: i32, %arg1: memref<16x256xf32, #tpu.memory_space<vmem>>, %arg2: memref<256x128xf32, #tpu.memory_space<vmem>>, %arg3: memref<8x128xf32, #tpu.memory_space<vmem>>, %arg4: memref<16x128xf32, #tpu.memory_space<vmem>>) attributes {dimension_semantics = [#tpu.dimension_semantics<parallel>], iteration_bounds = array<i64: 2>, scalar_prefetch = 0 : i64, scratch_operands = 0 : i64, tpu.core_type = #tpu.core_type<tc>, window_params = [{transform_indices = @transform_0, window_bounds = array<i64: 16, 256>}, {pipeline_mode = #tpu.pipeline_mode<synchronous>, transform_indices = @transform_1, window_bounds = array<i64: 256, 128>}, {pipeline_mode = #tpu.pipeline_mode<synchronous>, transform_indices = @transform_2, window_bounds = array<i64: 8, 128>}, {transform_indices = @transform_3, window_bounds = array<i64: 16, 128>}]} {
    %c0 = arith.constant 0 : index
    %c0_0 = arith.constant 0 : index
    %0 = vector.load %arg1[%c0, %c0_0] : memref<16x256xf32, #tpu.memory_space<vmem>>, vector<16x256xf32>
    %c0_1 = arith.constant 0 : index
    %c0_2 = arith.constant 0 : index
    %1 = vector.load %arg2[%c0_1, %c0_2] : memref<256x128xf32, #tpu.memory_space<vmem>>, vector<256x128xf32>
    %cst = arith.constant dense<0.000000e+00> : vector<16x128xf32>
    %2 = tpu.matmul %0, %1, %cst {dimension_numbers = #tpu.dot_dimension_numbers<[1], [0], [0], [1], [0, 0, 1, 1], [], []>} : vector<16x256xf32>, vector<256x128xf32>, vector<16x128xf32> -> vector<16x128xf32>
    %c0_3 = arith.constant 0 : index
    %c0_4 = arith.constant 0 : index
    %3 = vector.load %arg3[%c0_3, %c0_4] : memref<8x128xf32, #tpu.memory_space<vmem>>, vector<8x128xf32>
    %4 = vector.extract_strided_slice %3 {offsets = [0, 0], sizes = [1, 128], strides = [1, 1]} : vector<8x128xf32> to vector<1x128xf32>
    %5 = vector.extract_strided_slice %3 {offsets = [1, 0], sizes = [1, 128], strides = [1, 1]} : vector<8x128xf32> to vector<1x128xf32>
    %6 = vector.extract_strided_slice %3 {offsets = [2, 0], sizes = [1, 128], strides = [1, 1]} : vector<8x128xf32> to vector<1x128xf32>
    %7 = vector.extract_strided_slice %3 {offsets = [3, 0], sizes = [1, 128], strides = [1, 1]} : vector<8x128xf32> to vector<1x128xf32>
    %8 = vector.broadcast %4 : vector<1x128xf32> to vector<16x128xf32>
    %9 = arith.addf %2, %8 : vector<16x128xf32>
    %cst_5 = arith.constant dense<0.000000e+00> : vector<16xf32>
    %10 = vector.multi_reduction <add>, %9, %cst_5 [1] : vector<16x128xf32> to vector<16xf32>
    %11 = vector.shape_cast %10 : vector<16xf32> to vector<16x1xf32>
    %cst_6 = arith.constant 3.125000e-02 : f32
    %12 = vector.broadcast %cst_6 : f32 to vector<16x1xf32>
    %13 = arith.mulf %11, %12 : vector<16x1xf32>
    %14 = vector.broadcast %13 : vector<16x1xf32> to vector<16x128xf32>
    %15 = arith.subf %9, %14 : vector<16x128xf32>
    %16 = vector.broadcast %7 : vector<1x128xf32> to vector<16x128xf32>
    %17 = arith.mulf %15, %16 : vector<16x128xf32>
    %18 = arith.mulf %17, %17 : vector<16x128xf32>
    %cst_7 = arith.constant dense<0.000000e+00> : vector<16xf32>
    %19 = vector.multi_reduction <add>, %18, %cst_7 [1] : vector<16x128xf32> to vector<16xf32>
    %20 = vector.shape_cast %19 : vector<16xf32> to vector<16x1xf32>
    %cst_8 = arith.constant 3.125000e-02 : f32
    %21 = vector.broadcast %cst_8 : f32 to vector<16x1xf32>
    %22 = arith.mulf %20, %21 : vector<16x1xf32>
    %cst_9 = arith.constant 9.99999974E-6 : f32
    %23 = vector.broadcast %cst_9 : f32 to vector<16x1xf32>
    %24 = arith.addf %22, %23 : vector<16x1xf32>
    %25 = math.rsqrt %24 : vector<16x1xf32>
    %26 = vector.broadcast %5 : vector<1x128xf32> to vector<16x128xf32>
    %27 = vector.broadcast %25 : vector<16x1xf32> to vector<16x128xf32>
    %28 = arith.mulf %26, %27 : vector<16x128xf32>
    %29 = arith.mulf %17, %28 : vector<16x128xf32>
    %30 = vector.broadcast %6 : vector<1x128xf32> to vector<16x128xf32>
    %31 = arith.addf %29, %30 : vector<16x128xf32>
    %c0_10 = arith.constant 0 : index
    %c0_11 = arith.constant 0 : index
    %32 = vector.load %arg4[%c0_10, %c0_11] : memref<16x128xf32, #tpu.memory_space<vmem>>, vector<16x128xf32>
    tpu.vector_store %arg4[%c0_10, %c0_11], %31 {strides = array<i32>} : memref<16x128xf32, #tpu.memory_space<vmem>>, vector<16x128xf32>,
    return
  }
  func.func @transform_0(%arg0: i32) -> (i32, i32) {
    %c0_i32 = arith.constant 0 : i32
    %c0_i32_0 = arith.constant 0 : i32
    return %arg0, %c0_i32 : i32, i32
  }
  func.func @transform_1(%arg0: i32) -> (i32, i32) {
    %c0_i32 = arith.constant 0 : i32
    %c0_i32_0 = arith.constant 0 : i32
    %c0_i32_1 = arith.constant 0 : i32
    return %c0_i32, %c0_i32_0 : i32, i32
  }
  func.func @transform_2(%arg0: i32) -> (i32, i32) {
    %c0_i32 = arith.constant 0 : i32
    %c0_i32_0 = arith.constant 0 : i32
    %c0_i32_1 = arith.constant 0 : i32
    return %c0_i32, %c0_i32_0 : i32, i32
  }
  func.func @transform_3(%arg0: i32) -> (i32, i32) {
    %c0_i32 = arith.constant 0 : i32
    %c0_i32_0 = arith.constant 0 : i32
    return %arg0, %c0_i32 : i32, i32
  }
}

module attributes {stable_mosaic.version = 11 : i64} {
  func.func @_proj_ln_kernel(%arg0: i32, %arg1: memref<16x256xf32, #tpu.memory_space<vmem>>, %arg2: memref<256x128xf32, #tpu.memory_space<vmem>>, %arg3: memref<8x128xf32, #tpu.memory_space<vmem>>, %arg4: memref<16x128xf32, #tpu.memory_space<vmem>>) attributes {dimension_semantics = [#tpu.dimension_semantics<parallel>], iteration_bounds = array<i64: 2>, scalar_prefetch = 0 : i64, scratch_operands = 0 : i64, tpu.core_type = #tpu.core_type<tc>, window_params = [{transform_indices = @transform_0, window_bounds = array<i64: 16, 256>}, {pipeline_mode = #tpu.pipeline_mode<synchronous>, transform_indices = @transform_1, window_bounds = array<i64: 256, 128>}, {pipeline_mode = #tpu.pipeline_mode<synchronous>, transform_indices = @transform_2, window_bounds = array<i64: 8, 128>}, {transform_indices = @transform_3, window_bounds = array<i64: 16, 128>}]} {
    %c0 = arith.constant 0 : index
    %c0_0 = arith.constant 0 : index
    %0 = vector.load %arg1[%c0, %c0_0] : memref<16x256xf32, #tpu.memory_space<vmem>>, vector<16x256xf32>
    %c0_1 = arith.constant 0 : index
    %c0_2 = arith.constant 0 : index
    %1 = vector.load %arg2[%c0_1, %c0_2] : memref<256x128xf32, #tpu.memory_space<vmem>>, vector<256x128xf32>
    %cst = arith.constant dense<0.000000e+00> : vector<16x128xf32>
    %2 = tpu.matmul %0, %1, %cst {dimension_numbers = #tpu.dot_dimension_numbers<[1], [0], [0], [1], [0, 0, 1, 1], [], []>} : vector<16x256xf32>, vector<256x128xf32>, vector<16x128xf32> -> vector<16x128xf32>
    %c0_3 = arith.constant 0 : index
    %c0_4 = arith.constant 0 : index
    %3 = vector.load %arg3[%c0_3, %c0_4] : memref<8x128xf32, #tpu.memory_space<vmem>>, vector<8x128xf32>
    %4 = vector.extract_strided_slice %3 {offsets = [0, 0], sizes = [1, 128], strides = [1, 1]} : vector<8x128xf32> to vector<1x128xf32>
    %5 = vector.extract_strided_slice %3 {offsets = [1, 0], sizes = [1, 128], strides = [1, 1]} : vector<8x128xf32> to vector<1x128xf32>
    %6 = vector.extract_strided_slice %3 {offsets = [2, 0], sizes = [1, 128], strides = [1, 1]} : vector<8x128xf32> to vector<1x128xf32>
    %7 = vector.extract_strided_slice %3 {offsets = [3, 0], sizes = [1, 128], strides = [1, 1]} : vector<8x128xf32> to vector<1x128xf32>
    %8 = vector.broadcast %4 : vector<1x128xf32> to vector<16x128xf32>
    %9 = arith.addf %2, %8 : vector<16x128xf32>
    %cst_5 = arith.constant dense<0.000000e+00> : vector<16xf32>
    %10 = vector.multi_reduction <add>, %9, %cst_5 [1] : vector<16x128xf32> to vector<16xf32>
    %11 = vector.shape_cast %10 : vector<16xf32> to vector<16x1xf32>
    %cst_6 = arith.constant 3.125000e-02 : f32
    %12 = vector.broadcast %cst_6 : f32 to vector<16x1xf32>
    %13 = arith.mulf %11, %12 : vector<16x1xf32>
    %14 = vector.broadcast %13 : vector<16x1xf32> to vector<16x128xf32>
    %15 = arith.subf %9, %14 : vector<16x128xf32>
    %16 = vector.broadcast %7 : vector<1x128xf32> to vector<16x128xf32>
    %17 = arith.mulf %15, %16 : vector<16x128xf32>
    %18 = arith.mulf %17, %17 : vector<16x128xf32>
    %cst_7 = arith.constant dense<0.000000e+00> : vector<16xf32>
    %19 = vector.multi_reduction <add>, %18, %cst_7 [1] : vector<16x128xf32> to vector<16xf32>
    %20 = vector.shape_cast %19 : vector<16xf32> to vector<16x1xf32>
    %cst_8 = arith.constant 3.125000e-02 : f32
    %21 = vector.broadcast %cst_8 : f32 to vector<16x1xf32>
    %22 = arith.mulf %20, %21 : vector<16x1xf32>
    %cst_9 = arith.constant 9.99999974E-6 : f32
    %23 = vector.broadcast %cst_9 : f32 to vector<16x1xf32>
    %24 = arith.addf %22, %23 : vector<16x1xf32>
    %25 = math.rsqrt %24 : vector<16x1xf32>
    %26 = vector.broadcast %5 : vector<1x128xf32> to vector<16x128xf32>
    %27 = vector.broadcast %25 : vector<16x1xf32> to vector<16x128xf32>
    %28 = arith.mulf %26, %27 : vector<16x128xf32>
    %29 = arith.mulf %17, %28 : vector<16x128xf32>
    %30 = vector.broadcast %6 : vector<1x128xf32> to vector<16x128xf32>
    %31 = arith.addf %29, %30 : vector<16x128xf32>
    %c0_10 = arith.constant 0 : index
    %c0_11 = arith.constant 0 : index
    %32 = vector.load %arg4[%c0_10, %c0_11] : memref<16x128xf32, #tpu.memory_space<vmem>>, vector<16x128xf32>
    tpu.vector_store %arg4[%c0_10, %c0_11], %31 {strides = array<i32>} : memref<16x128xf32, #tpu.memory_space<vmem>>, vector<16x128xf32>,
    return
  }
  func.func @transform_0(%arg0: i32) -> (i32, i32) {
    %c0_i32 = arith.constant 0 : i32
    %c0_i32_0 = arith.constant 0 : i32
    return %arg0, %c0_i32 : i32, i32
  }
  func.func @transform_1(%arg0: i32) -> (i32, i32) {
    %c0_i32 = arith.constant 0 : i32
    %c0_i32_0 = arith.constant 0 : i32
    %c0_i32_1 = arith.constant 0 : i32
    return %c0_i32, %c0_i32_0 : i32, i32
  }
  func.func @transform_2(%arg0: i32) -> (i32, i32) {
    %c0_i32 = arith.constant 0 : i32
    %c0_i32_0 = arith.constant 0 : i32
    %c0_i32_1 = arith.constant 0 : i32
    return %c0_i32, %c0_i32_0 : i32, i32
  }
  func.func @transform_3(%arg0: i32) -> (i32, i32) {
    %c0_i32 = arith.constant 0 : i32
    %c0_i32_0 = arith.constant 0 : i32
    return %arg0, %c0_i32 : i32, i32
  }
}

</mosaic_0001>

<llo_original>
// kernel: tpu_custom_call.1
$region0: #{tpu_custom_call.1}
  #allocation0 [shape = 'u32[]', space=smem, size = 0x4, offset = 0x4, fixed_abs, tag = 'smem constant byte address 0x4 - core index']
  #allocation1 [shape = 'u32[72,128]{1,0:T(1,128)}', space=vmem, size = 0x9000, scoped, tag = 'internal scratch']
  %s0 = inlined_call_operand.hbm [shape: f32[32,256], index: 0, kind: input, shape index: {}]
  %s1 = inlined_call_operand.hbm [shape: f32[256,128], index: 1, kind: input, shape index: {}]
  %s2 = inlined_call_operand.hbm [shape: f32[8,128], index: 2, kind: input, shape index: {}]
  %s3 = inlined_call_operand.hbm [shape: f32[32,128], index: 3, kind: output, shape index: {}]
  %s4 = sld [smem:[#allocation0]]
  $region57: #{tpu_custom_call.1} parent=0
    _
  %s6 = ssub.s32 1, %s4
  %s7 = scalar_select 0, %s6, %s4
  $region1: #{tpu_custom_call.1} parent=0
    #allocation2 [shape = 'u8[32768]{0}', space=vmem, size = 0x8000, scoped, tag = 'input window, operand 0']
    #allocation3 [shape = 's32[2]{0}', space=sflag, size = 0x8, scoped, tag = 'scoped memory for tpu_custom_call.1']
    #allocation4 [shape = 's32[2]{0}', space=sflag, size = 0x8, scoped, tag = 'scoped memory for tpu_custom_call.1']
    #allocation5 [shape = 'u8[131072]{0}', space=vmem, size = 0x20000, scoped, tag = 'input window, operand 1, single buffered']
    #allocation6 [shape = 's32[1]{0}', space=sflag, size = 0x4, scoped, tag = 'scoped memory for tpu_custom_call.1']
    #allocation7 [shape = 'u8[4096]{0}', space=vmem, size = 0x1000, scoped, tag = 'input window, operand 2, single buffered']
    #allocation8 [shape = 'u8[16384]{0}', space=vmem, size = 0x4000, scoped, tag = 'output window, operand 0']
    %8 = vsyncpa [#allocation3], 0
    %s9 = scalar_lea.sflag [#allocation3], 1
    %10 = vsyncpa %s9, 0
    %11 = vsyncpa [#allocation6], 0
    %12 = vsyncpa [#allocation4], 0
    %s13 = scalar_lea.sflag [#allocation4], 1
    %14 = vsyncpa %s13, 0
    loop: start=0, step=1, limit=4
    $region2: #{tpu_custom_call.1} parent=1 // loop_pre_header
      _
    $region3: #{tpu_custom_call.1} parent=1 // loop_header
      %s16 = sphi 0, %s20
      %p17 = scmp.ge.s32.totalorder %s16, 4
      %s26 = sphi 0, %s28
      %s29 = sphi 0, %s26
      %s30 = sphi 0, %s29
      %s46 = sphi 0, %s30
      %s50 = sphi 0, %s50
      %s52 = sphi 0, %s50
      %s53 = sphi 0, %s52
      %s67 = sphi 0, %s53
      %s71 = sphi 0, %s71
      %s73 = sphi 0, %s71
      %s74 = sphi 0, %s73
      %s88 = sphi 0, %s74
      %s94 = sphi 0, %s96
      %s97 = sphi 0, %s94
      %s98 = sphi 0, %s97
      %s114 = sphi 0, %s98
    $region4: #{tpu_custom_call.1} parent=1 // loop_header_branch
      %19 = sbr.rel (%p17) target = $region8
    $region5: #{tpu_custom_call.1} parent=1 // loop_body
      %s21 = ssub.s32 %s16, 1
      %s22 = ssub.s32 %s16, 2
      %s23 = sadd.s32 %s16, 1
      %s24 = ssub.s32 %s16, %s23
      %p25 = scmp.eq.s32.totalorder %s24, 0
      %s27 = sadd.s32 %s26, 1
      %s28 = scalar_select %p25, %s26, %s27
      %p31 = pneg %p25
      %p32 = scmp.eq.s32.totalorder %s16, 1
      %p33 = por %p31, %p32
      %p34 = scmp.ne.s32.totalorder %s26, %s29
      %p35 = scmp.eq.s32.totalorder %s16, 0
      %p36 = por %p34, %p35
      %p37 = scmp.ne.s32.totalorder %s26, %s29
      %p38 = scmp.eq.s32.totalorder %s21, 1
      %p39 = por %p37, %p38
      %p40 = scmp.ne.s32.totalorder %s29, %s30
      %p41 = scmp.eq.s32.totalorder %s21, 0
      %p42 = por %p40, %p41
      %p43 = scmp.ne.s32.totalorder %s29, %s30
      %p44 = scmp.eq.s32.totalorder %s22, 1
      %p45 = por %p43, %p44
      %p47 = scmp.ne.s32.totalorder %s30, %s46
      %p48 = scmp.eq.s32.totalorder %s22, 0
      %p49 = por %p47, %p48
      %s51 = sadd.s32 %s50, 1
      %p54 = scmp.eq.s32.totalorder %s16, 1
      %p55 = scmp.ne.s32.totalorder %s50, %s52
      %p56 = scmp.eq.s32.totalorder %s16, 0
      %p57 = por %p55, %p56
      %p58 = scmp.ne.s32.totalorder %s50, %s52
      %p59 = scmp.eq.s32.totalorder %s21, 1
      %p60 = por %p58, %p59
      %p61 = scmp.ne.s32.totalorder %s52, %s53
      %p62 = scmp.eq.s32.totalorder %s21, 0
      %p63 = por %p61, %p62
      %p64 = scmp.ne.s32.totalorder %s52, %s53
      %p65 = scmp.eq.s32.totalorder %s22, 1
      %p66 = por %p64, %p65
      %p68 = scmp.ne.s32.totalorder %s53, %s67
      %p69 = scmp.eq.s32.totalorder %s22, 0
      %p70 = por %p68, %p69
      %s72 = sadd.s32 %s71, 1
      %p75 = scmp.eq.s32.totalorder %s16, 1
      %p76 = scmp.ne.s32.totalorder %s71, %s73
      %p77 = scmp.eq.s32.totalorder %s16, 0
      %p78 = por %p76, %p77
      %p79 = scmp.ne.s32.totalorder %s71, %s73
      %p80 = scmp.eq.s32.totalorder %s21, 1
      %p81 = por %p79, %p80
      %p82 = scmp.ne.s32.totalorder %s73, %s74
      %p83 = scmp.eq.s32.totalorder %s21, 0
      %p84 = por %p82, %p83
      %p85 = scmp.ne.s32.totalorder %s73, %s74
      %p86 = scmp.eq.s32.totalorder %s22, 1
      %p87 = por %p85, %p86
      %p89 = scmp.ne.s32.totalorder %s74, %s88
      %p90 = scmp.eq.s32.totalorder %s22, 0
      %p91 = por %p89, %p90
      %s92 = ssub.s32 %s16, %s23
      %p93 = scmp.eq.s32.totalorder %s92, 0
      %s95 = sadd.s32 %s94, 1
      %s96 = scalar_select %p93, %s94, %s95
      %p99 = pneg %p93
      %p100 = scmp.eq.s32.totalorder %s16, 1
      %p101 = por %p99, %p100
      %p102 = scmp.ne.s32.totalorder %s94, %s97
      %p103 = scmp.eq.s32.totalorder %s16, 0
      %p104 = por %p102, %p103
      %p105 = scmp.ne.s32.totalorder %s94, %s97
      %p106 = scmp.eq.s32.totalorder %s21, 1
      %p107 = por %p105, %p106
      %p108 = scmp.ne.s32.totalorder %s97, %s98
      %p109 = scmp.eq.s32.totalorder %s21, 0
      %p110 = por %p108, %p109
      %p111 = scmp.ne.s32.totalorder %s97, %s98
      %p112 = scmp.eq.s32.totalorder %s22, 1
      %p113 = por %p111, %p112
      %p115 = scmp.ne.s32.totalorder %s98, %s114
      %p116 = scmp.eq.s32.totalorder %s22, 0
      %p117 = por %p115, %p116
      %p118 = scmp.le.s32.totalorder 1, %s16
      %p119 = scmp.lt.s32.totalorder %s16, 3
      %p120 = pnand %p118, %p119
      %p121 = pneg %p120
      // Predicated region
      $region9: #{tpu_custom_call.1} parent=5 // pred_check
        _
      $region10: #{tpu_custom_call.1} parent=5 // pred_check_branch
        %123 = sbr.rel (%p120) target = $region12
      $region11: #{tpu_custom_call.1} parent=5 // pred_region
        %s124 = ssub.s32 %s16, 1
        // Predicated region
        $region13: #{tpu_custom_call.1} parent=11 // pred_check
          %p125 = pneg %p63
        $region14: #{tpu_custom_call.1} parent=11 // pred_check_branch
          %127 = sbr.rel (%p125) target = $region16
        $region15: #{tpu_custom_call.1} parent=11 // pred_region
          %129 = vsyncadd [#allocation6], 0
          %s130 = sshll.u32 %s1, 4
          %s131 = int_to_ptr.hbm [resolvable:$true] %s130
          %s132 = sshll.u32 [#allocation5], 4
          %s133 = int_to_ptr.vmem [resolvable:$true] %s132
          %138 = dma.hbm_to_vmem [thread:$0]  %s131, 4096, %s133, [#allocation6], 128, 128, 8
        $region16: #{tpu_custom_call.1} parent=11 // pred_fallthru
          _
        // Predicated region
        $region17: #{tpu_custom_call.1} parent=11 // pred_check
          %p139 = pneg %p84
        $region18: #{tpu_custom_call.1} parent=11 // pred_check_branch
          %141 = sbr.rel (%p139) target = $region20
        $region19: #{tpu_custom_call.1} parent=11 // pred_region
          %143 = vsyncadd [#allocation6], 0
          %s145 = sshll.u32 %s2, 4
          %s146 = int_to_ptr.hbm [resolvable:$true] %s145
          %s147 = sshll.u32 [#allocation7], 4
          %s148 = int_to_ptr.vmem [resolvable:$true] %s147
          %150 = dma.hbm_to_vmem [thread:$0]  %s146, 128, %s148, [#allocation6]
        $region20: #{tpu_custom_call.1} parent=11 // pred_fallthru
          _
      $region12: #{tpu_custom_call.1} parent=5 // pred_fallthru
        _
      %p151 = scmp.lt.s32.totalorder %s16, 2
      // Predicated region
      $region21: #{tpu_custom_call.1} parent=5 // pred_check
        %p152 = pneg %p151
      $region22: #{tpu_custom_call.1} parent=5 // pred_check_branch
        %154 = sbr.rel (%p152) target = $region24
      $region23: #{tpu_custom_call.1} parent=5 // pred_region
        // Predicated region
        $region25: #{tpu_custom_call.1} parent=23 // pred_check
          %p155 = pneg %p36
        $region26: #{tpu_custom_call.1} parent=23 // pred_check_branch
          %157 = sbr.rel (%p155) target = $region28
        $region27: #{tpu_custom_call.1} parent=23 // pred_region
          %s158 = sand.u32 %s26, 1
          %s159 = scalar_lea.sflag [#allocation3], %s158
          %s160 = sand.u32 %s26, 1
          %s161 = smul.addr %s160, 32
          %s162 = scalar_lea.vmem [#allocation2], %s161
          %s163 = smul.u32 2, %s16
          %165 = vsyncadd %s159, 0
          %s166 = smul.addr %s163, 2
          %s167 = smul.addr %s166, 8
          %s168 = scalar_lea.hbm %s0, %s167
          %s169 = sshll.u32 %s168, 4
          %s170 = int_to_ptr.hbm [resolvable:$true] %s169
          %s171 = sshll.u32 %s162, 4
          %s172 = int_to_ptr.vmem [resolvable:$true] %s171
          %177 = dma.hbm_to_vmem [thread:$0]  %s170, 512, %s172, %s159, 256, 256, 16
        $region28: #{tpu_custom_call.1} parent=23 // pred_fallthru
          _
      $region24: #{tpu_custom_call.1} parent=5 // pred_fallthru
        _
      %p178 = scmp.le.s32.totalorder 1, %s16
      %p179 = scmp.lt.s32.totalorder %s16, 3
      %p180 = pnand %p178, %p179
      %p181 = pneg %p180
      // Predicated region
      $region29: #{tpu_custom_call.1} parent=5 // pred_check
        _
      $region30: #{tpu_custom_call.1} parent=5 // pred_check_branch
        %183 = sbr.rel (%p180) target = $region32
      $region31: #{tpu_custom_call.1} parent=5 // pred_region
        %s184 = ssub.s32 %s16, 1
        %s185 = sand.u32 %s29, 1
        %s186 = scalar_lea.sflag [#allocation3], %s185
        %s187 = sand.u32 %s29, 1
        %s188 = smul.addr %s187, 32
        %s189 = scalar_lea.vmem [#allocation2], %s188
        // Predicated region
        $region33: #{tpu_custom_call.1} parent=31 // pred_check
          %p190 = pneg %p42
        $region34: #{tpu_custom_call.1} parent=31 // pred_check_branch
          %192 = sbr.rel (%p190) target = $region36
        $region35: #{tpu_custom_call.1} parent=31 // pred_region
          %194 = dma.done %s186, 512
        $region36: #{tpu_custom_call.1} parent=31 // pred_fallthru
          _
        // Predicated region
        $region37: #{tpu_custom_call.1} parent=31 // pred_check
          %p195 = pneg %p63
        $region38: #{tpu_custom_call.1} parent=31 // pred_check_branch
          %197 = sbr.rel (%p195) target = $region40
        $region39: #{tpu_custom_call.1} parent=31 // pred_region
          %199 = dma.done [#allocation6], 4096
        $region40: #{tpu_custom_call.1} parent=31 // pred_fallthru
          _
        // Predicated region
        $region41: #{tpu_custom_call.1} parent=31 // pred_check
          %p200 = pneg %p84
        $region42: #{tpu_custom_call.1} parent=31 // pred_check_branch
          %202 = sbr.rel (%p200) target = $region44
        $region43: #{tpu_custom_call.1} parent=31 // pred_region
          %204 = dma.done [#allocation6], 128
        $region44: #{tpu_custom_call.1} parent=31 // pred_fallthru
          _
        %s205 = sand.u32 %s29, 1
        %s206 = scalar_lea.sflag [#allocation3], %s205
        %s207 = sand.u32 %s29, 1
        %s208 = smul.addr %s207, 32
        %s209 = scalar_lea.vmem [#allocation2], %s208
        %p210 = pneg %p42
        %p211 = pneg %p39
        %p212 = pneg %p63
        %p213 = pneg %p60
        %p214 = pneg %p84
        %p215 = pneg %p81
        %p216 = pneg %p110
        %p217 = pneg %p107
        %s218 = sand.u32 %s97, 1
        %s219 = scalar_lea.sflag [#allocation4], %s218
        %s220 = sand.u32 %s97, 1
        %s221 = smul.addr %s220, 16
        %s222 = scalar_lea.vmem [#allocation8], %s221
        %s223 = smul.u32 2, %s21
        %s224 = smul.u32 2, %s21
        %v225 = vld [vmem:[%s189] sm:$0xff]
        %v226 = vld [vmem:[%s189 + $0x8] sm:$0xff]
        %v227 = vld [vmem:[%s189 + $0x10] sm:$0xff]
        %v228 = vld [vmem:[%s189 + $0x18] sm:$0xff]
        %v229 = vld [vmem:[#allocation5] sm:$0xff]
        %v230 = vld [vmem:[#allocation5 + $0x8] sm:$0xff]
        %v231 = vld [vmem:[#allocation5 + $0x10] sm:$0xff]
        %v232 = vld [vmem:[#allocation5 + $0x18] sm:$0xff]
        %v233 = vld [vmem:[#allocation5 + $0x20] sm:$0xff]
        %v234 = vld [vmem:[#allocation5 + $0x28] sm:$0xff]
        %v235 = vld [vmem:[#allocation5 + $0x30] sm:$0xff]
        %v236 = vld [vmem:[#allocation5 + $0x38] sm:$0xff]
        %v237 = vld [vmem:[#allocation5 + $0x40] sm:$0xff]
        %v238 = vld [vmem:[#allocation5 + $0x48] sm:$0xff]
        %v239 = vld [vmem:[#allocation5 + $0x50] sm:$0xff]
        %v240 = vld [vmem:[#allocation5 + $0x58] sm:$0xff]
        %v241 = vld [vmem:[#allocation5 + $0x60] sm:$0xff]
        %v242 = vld [vmem:[#allocation5 + $0x68] sm:$0xff]
        %v243 = vld [vmem:[#allocation5 + $0x70] sm:$0xff]
        %v244 = vld [vmem:[#allocation5 + $0x78] sm:$0xff]
        %v245 = vld [vmem:[#allocation5 + $0x80] sm:$0xff]
        %v246 = vld [vmem:[#allocation5 + $0x88] sm:$0xff]
        %v247 = vld [vmem:[#allocation5 + $0x90] sm:$0xff]
        %v248 = vld [vmem:[#allocation5 + $0x98] sm:$0xff]
        %v249 = vld [vmem:[#allocation5 + $0xa0] sm:$0xff]
        %v250 = vld [vmem:[#allocation5 + $0xa8] sm:$0xff]
        %v251 = vld [vmem:[#allocation5 + $0xb0] sm:$0xff]
        %v252 = vld [vmem:[#allocation5 + $0xb8] sm:$0xff]
        %v253 = vld [vmem:[#allocation5 + $0xc0] sm:$0xff]
        %v254 = vld [vmem:[#allocation5 + $0xc8] sm:$0xff]
        %v255 = vld [vmem:[#allocation5 + $0xd0] sm:$0xff]
        %v256 = vld [vmem:[#allocation5 + $0xd8] sm:$0xff]
        %v257 = vld [vmem:[#allocation5 + $0xe0] sm:$0xff]
        %v258 = vld [vmem:[#allocation5 + $0xe8] sm:$0xff]
        %v259 = vld [vmem:[#allocation5 + $0xf0] sm:$0xff]
        %v260 = vld [vmem:[#allocation5 + $0xf8] sm:$0xff]
        %v261 = vld [vmem:[#allocation7] sm:$0xff]
        %v262 = vperm.slane %v261, 0
        %263 = vmatpush.msra.mxu0 %v244
        %264 = vmatpush.msra.mxu0 %v243
        %265 = vmatpush.msra.mxu0 %v242
        %266 = vmatpush.msra.mxu0 %v241
        %267 = vmatpush.msra.mxu0 %v240
        %268 = vmatpush.msra.mxu0 %v239
        %269 = vmatpush.msra.mxu0 %v238
        %270 = vmatpush.msra.mxu0 %v237
        %271 = vmatpush.msra.mxu0 %v236
        %272 = vmatpush.msra.mxu0 %v235
        %273 = vmatpush.msra.mxu0 %v234
        %274 = vmatpush.msra.mxu0 %v233
        %275 = vmatpush.msra.mxu0 %v232
        %276 = vmatpush.msra.mxu0 %v231
        %277 = vmatpush.msra.mxu0 %v230
        %278 = vmatpush.msra.mxu0 %v229
        %279 = vmatmul.f32.gmra.mxu0 %v225
        %v280 = vpop.f32.mrf.mxu0
        %v281 = vadd.f32 %v262, %v280
        %282 = vmatmul.f32.gmra.mxu0 %v227
        %v283 = vpop.f32.mrf.mxu0
        %v284 = vadd.f32 %v262, %v283
        %285 = vdwg.mxu0
        %286 = vmatpush.msra.mxu0 %v260
        %287 = vmatpush.msra.mxu0 %v259
        %288 = vmatpush.msra.mxu0 %v258
        %289 = vmatpush.msra.mxu0 %v257
        %290 = vmatpush.msra.mxu0 %v256
        %291 = vmatpush.msra.mxu0 %v255
        %292 = vmatpush.msra.mxu0 %v254
        %293 = vmatpush.msra.mxu0 %v253
        %294 = vmatpush.msra.mxu0 %v252
        %295 = vmatpush.msra.mxu0 %v251
        %296 = vmatpush.msra.mxu0 %v250
        %297 = vmatpush.msra.mxu0 %v249
        %298 = vmatpush.msra.mxu0 %v248
        %299 = vmatpush.msra.mxu0 %v247
        %300 = vmatpush.msra.mxu0 %v246
        %301 = vmatpush.msra.mxu0 %v245
        %302 = vmatmul.f32.gmra.mxu0 %v226
        %v303 = vpop.f32.mrf.mxu0
        %v304 = vadd.f32 %v281, %v303
        %305 = vmatmul.f32.gmra.mxu0 %v228
        %v306 = vpop.f32.mrf.mxu0
        %v307 = vadd.f32 %v284, %v306
        %308 = vdwg.mxu0
        %309 = vadd.xlane.f32.xlu0 %v304
        %v310 = vpop.xlane.xlu0 %309
        %311 = vadd.xlane.f32.xlu0 %v307
        %v312 = vpop.xlane.xlu0 %311
        %v313 = vmul.f32 %v310, 0.03125
        %v314 = vmul.f32 %v312, 0.03125
        %v315 = vsub.f32 %v304, %v313
        %v316 = vsub.f32 %v307, %v314
        %v317 = vperm.slane %v261, 3
        %v318 = vmul.f32 %v315, %v317
        %v319 = vmul.f32 %v316, %v317
        %v320 = vmul.f32 %v318, %v318
        %v321 = vmul.f32 %v319, %v319
        %322 = vadd.xlane.f32.xlu0 %v320
        %v323 = vpop.xlane.xlu0 %322
        %324 = vadd.xlane.f32.xlu0 %v321
        %v325 = vpop.xlane.xlu0 %324
        %v326 = vmul.f32 %v323, 0.03125
        %v327 = vmul.f32 %v325, 0.03125
        %v328 = vadd.f32 %v326, 1e-05
        %v329 = vadd.f32 %v327, 1e-05
        %v330 = vrsqrt.pop %v328
        %v331 = vmul.f32 %v330, %v328
        %v332 = vmul.f32 %v331, %v330
        %v333 = vmul.f32 0.5, %v332
        %v334 = vsub.f32 1.5, %v333
        %v335 = vmul.f32 %v330, %v334
        %vm336 = vweird.f32 %v328
        %vm337 = vweird.f32 %v330
        %vm338 = vmor %vm336, %vm337
        %v339 = vsel %vm338, %v330, %v335
        %v340 = vrsqrt.pop %v329
        %v341 = vmul.f32 %v340, %v329
        %v342 = vmul.f32 %v341, %v340
        %v343 = vmul.f32 0.5, %v342
        %v344 = vsub.f32 1.5, %v343
        %v345 = vmul.f32 %v340, %v344
        %vm346 = vweird.f32 %v329
        %vm347 = vweird.f32 %v340
        %vm348 = vmor %vm346, %vm347
        %v349 = vsel %vm348, %v340, %v345
        %v350 = vperm.slane %v261, 1
        %v351 = vmul.f32 %v350, %v339
        %v352 = vmul.f32 %v350, %v349
        %v353 = vmul.f32 %v318, %v351
        %v354 = vmul.f32 %v319, %v352
        %v355 = vperm.slane %v261, 2
        %v356 = vadd.f32 %v353, %v355
        %v357 = vadd.f32 %v354, %v355
        %358 = vst [vmem:[%s222] sm:$0xff] %v356
        %359 = vst [vmem:[%s222 + $0x8] sm:$0xff] %v357
        %s360 = sand.u32 %s97, 1
        %s361 = scalar_lea.sflag [#allocation4], %s360
        %s362 = sand.u32 %s97, 1
        %s363 = smul.addr %s362, 16
        %s364 = scalar_lea.vmem [#allocation8], %s363
        // Predicated region
        $region45: #{tpu_custom_call.1} parent=31 // pred_check
          %p365 = pneg %p107
        $region46: #{tpu_custom_call.1} parent=31 // pred_check_branch
          %367 = sbr.rel (%p365) target = $region48
        $region47: #{tpu_custom_call.1} parent=31 // pred_region
          %s368 = smul.u32 2, %s21
          %370 = vsyncadd %s361, 0
          %s371 = smul.addr %s368, 8
          %s372 = scalar_lea.hbm %s3, %s371
          %s373 = sshll.u32 %s364, 4
          %s374 = int_to_ptr.vmem [resolvable:$true] %s373
          %s375 = sshll.u32 %s372, 4
          %s376 = int_to_ptr.hbm [resolvable:$true] %s375
          %381 = dma.vmem_to_hbm [thread:$0]  %s374, 256, %s376, %s361, 128, 128, 8
        $region48: #{tpu_custom_call.1} parent=31 // pred_fallthru
          _
      $region32: #{tpu_custom_call.1} parent=5 // pred_fallthru
        _
      %p382 = scmp.le.s32.totalorder 2, %s16
      // Predicated region
      $region49: #{tpu_custom_call.1} parent=5 // pred_check
        %p383 = pneg %p382
      $region50: #{tpu_custom_call.1} parent=5 // pred_check_branch
        %385 = sbr.rel (%p383) target = $region52
      $region51: #{tpu_custom_call.1} parent=5 // pred_region
        %s386 = ssub.s32 %s16, 2
        // Predicated region
        $region53: #{tpu_custom_call.1} parent=51 // pred_check
          %p387 = pneg %p113
        $region54: #{tpu_custom_call.1} parent=51 // pred_check_branch
          %389 = sbr.rel (%p387) target = $region56
        $region55: #{tpu_custom_call.1} parent=51 // pred_region
          %s390 = sand.u32 %s98, 1
          %s391 = scalar_lea.sflag [#allocation4], %s390
          %s392 = sand.u32 %s98, 1
          %s393 = smul.addr %s392, 16
          %s394 = scalar_lea.vmem [#allocation8], %s393
          %396 = dma.done %s391, 256
        $region56: #{tpu_custom_call.1} parent=51 // pred_fallthru
          _
      $region52: #{tpu_custom_call.1} parent=5 // pred_fallthru
        _
    $region6: #{tpu_custom_call.1} parent=1 // loop_footer
      %s20 = sadd.s32 1, %s16
    $region7: #{tpu_custom_call.1} parent=1 // loop_footer_branch
      %15 = sbr.rel target = $region3
    $region8: #{tpu_custom_call.1} parent=1 // loop_exit
      _
    %397 = vsyncpa [#allocation3], 1
    %s398 = scalar_lea.sflag [#allocation3], 1
    %399 = vsyncpa %s398, 1
    %400 = vsyncpa [#allocation6], 1
    %401 = vsyncpa [#allocation4], 1
    %s402 = scalar_lea.sflag [#allocation4], 1
    %403 = vsyncpa %s402, 1

// kernel: tpu_custom_call.1
$region0: #{tpu_custom_call.1}
  #allocation0 [shape = 'u32[]', space=smem, size = 0x4, offset = 0x4, fixed_abs, tag = 'smem constant byte address 0x4 - core index']
  #allocation1 [shape = 'u32[72,128]{1,0:T(1,128)}', space=vmem, size = 0x9000, scoped, tag = 'internal scratch']
  %s0 = inlined_call_operand.hbm [shape: f32[32,256], index: 0, kind: input, shape index: {}]
  %s1 = inlined_call_operand.hbm [shape: f32[256,128], index: 1, kind: input, shape index: {}]
  %s2 = inlined_call_operand.hbm [shape: f32[8,128], index: 2, kind: input, shape index: {}]
  %s3 = inlined_call_operand.hbm [shape: f32[32,128], index: 3, kind: output, shape index: {}]
  %s4 = sld [smem:[#allocation0]]
  $region57: #{tpu_custom_call.1} parent=0
    _
  %s6 = ssub.s32 1, %s4
  %s7 = scalar_select 0, %s6, %s4
  $region1: #{tpu_custom_call.1} parent=0
    #allocation2 [shape = 'u8[32768]{0}', space=vmem, size = 0x8000, scoped, tag = 'input window, operand 0']
    #allocation3 [shape = 's32[2]{0}', space=sflag, size = 0x8, scoped, tag = 'scoped memory for tpu_custom_call.1']
    #allocation4 [shape = 's32[2]{0}', space=sflag, size = 0x8, scoped, tag = 'scoped memory for tpu_custom_call.1']
    #allocation5 [shape = 'u8[131072]{0}', space=vmem, size = 0x20000, scoped, tag = 'input window, operand 1, single buffered']
    #allocation6 [shape = 's32[1]{0}', space=sflag, size = 0x4, scoped, tag = 'scoped memory for tpu_custom_call.1']
    #allocation7 [shape = 'u8[4096]{0}', space=vmem, size = 0x1000, scoped, tag = 'input window, operand 2, single buffered']
    #allocation8 [shape = 'u8[16384]{0}', space=vmem, size = 0x4000, scoped, tag = 'output window, operand 0']
    %8 = vsyncpa [#allocation3], 0
    %s9 = scalar_lea.sflag [#allocation3], 1
    %10 = vsyncpa %s9, 0
    %11 = vsyncpa [#allocation6], 0
    %12 = vsyncpa [#allocation4], 0
    %s13 = scalar_lea.sflag [#allocation4], 1
    %14 = vsyncpa %s13, 0
    loop: start=0, step=1, limit=4
    $region2: #{tpu_custom_call.1} parent=1 // loop_pre_header
      _
    $region3: #{tpu_custom_call.1} parent=1 // loop_header
      %s16 = sphi 0, %s20
      %p17 = scmp.ge.s32.totalorder %s16, 4
      %s26 = sphi 0, %s28
      %s29 = sphi 0, %s26
      %s30 = sphi 0, %s29
      %s46 = sphi 0, %s30
      %s50 = sphi 0, %s50
      %s52 = sphi 0, %s50
      %s53 = sphi 0, %s52
      %s67 = sphi 0, %s53
      %s71 = sphi 0, %s71
      %s73 = sphi 0, %s71
      %s74 = sphi 0, %s73
      %s88 = sphi 0, %s74
      %s94 = sphi 0, %s96
      %s97 = sphi 0, %s94
      %s98 = sphi 0, %s97
      %s114 = sphi 0, %s98
    $region4: #{tpu_custom_call.1} parent=1 // loop_header_branch
      %19 = sbr.rel (%p17) target = $region8
    $region5: #{tpu_custom_call.1} parent=1 // loop_body
      %s21 = ssub.s32 %s16, 1
      %s22 = ssub.s32 %s16, 2
      %s23 = sadd.s32 %s16, 1
      %s24 = ssub.s32 %s16, %s23
      %p25 = scmp.eq.s32.totalorder %s24, 0
      %s27 = sadd.s32 %s26, 1
      %s28 = scalar_select %p25, %s26, %s27
      %p31 = pneg %p25
      %p32 = scmp.eq.s32.totalorder %s16, 1
      %p33 = por %p31, %p32
      %p34 = scmp.ne.s32.totalorder %s26, %s29
      %p35 = scmp.eq.s32.totalorder %s16, 0
      %p36 = por %p34, %p35
      %p37 = scmp.ne.s32.totalorder %s26, %s29
      %p38 = scmp.eq.s32.totalorder %s21, 1
      %p39 = por %p37, %p38
      %p40 = scmp.ne.s32.totalorder %s29, %s30
      %p41 = scmp.eq.s32.totalorder %s21, 0
      %p42 = por %p40, %p41
      %p43 = scmp.ne.s32.totalorder %s29, %s30
      %p44 = scmp.eq.s32.totalorder %s22, 1
      %p45 = por %p43, %p44
      %p47 = scmp.ne.s32.totalorder %s30, %s46
      %p48 = scmp.eq.s32.totalorder %s22, 0
      %p49 = por %p47, %p48
      %s51 = sadd.s32 %s50, 1
      %p54 = scmp.eq.s32.totalorder %s16, 1
      %p55 = scmp.ne.s32.totalorder %s50, %s52
      %p56 = scmp.eq.s32.totalorder %s16, 0
      %p57 = por %p55, %p56
      %p58 = scmp.ne.s32.totalorder %s50, %s52
      %p59 = scmp.eq.s32.totalorder %s21, 1
      %p60 = por %p58, %p59
      %p61 = scmp.ne.s32.totalorder %s52, %s53
      %p62 = scmp.eq.s32.totalorder %s21, 0
      %p63 = por %p61, %p62
      %p64 = scmp.ne.s32.totalorder %s52, %s53
      %p65 = scmp.eq.s32.totalorder %s22, 1
      %p66 = por %p64, %p65
      %p68 = scmp.ne.s32.totalorder %s53, %s67
      %p69 = scmp.eq.s32.totalorder %s22, 0
      %p70 = por %p68, %p69
      %s72 = sadd.s32 %s71, 1
      %p75 = scmp.eq.s32.totalorder %s16, 1
      %p76 = scmp.ne.s32.totalorder %s71, %s73
      %p77 = scmp.eq.s32.totalorder %s16, 0
      %p78 = por %p76, %p77
      %p79 = scmp.ne.s32.totalorder %s71, %s73
      %p80 = scmp.eq.s32.totalorder %s21, 1
      %p81 = por %p79, %p80
      %p82 = scmp.ne.s32.totalorder %s73, %s74
      %p83 = scmp.eq.s32.totalorder %s21, 0
      %p84 = por %p82, %p83
      %p85 = scmp.ne.s32.totalorder %s73, %s74
      %p86 = scmp.eq.s32.totalorder %s22, 1
      %p87 = por %p85, %p86
      %p89 = scmp.ne.s32.totalorder %s74, %s88
      %p90 = scmp.eq.s32.totalorder %s22, 0
      %p91 = por %p89, %p90
      %s92 = ssub.s32 %s16, %s23
      %p93 = scmp.eq.s32.totalorder %s92, 0
      %s95 = sadd.s32 %s94, 1
      %s96 = scalar_select %p93, %s94, %s95
      %p99 = pneg %p93
      %p100 = scmp.eq.s32.totalorder %s16, 1
      %p101 = por %p99, %p100
      %p102 = scmp.ne.s32.totalorder %s94, %s97
      %p103 = scmp.eq.s32.totalorder %s16, 0
      %p104 = por %p102, %p103
      %p105 = scmp.ne.s32.totalorder %s94, %s97
      %p106 = scmp.eq.s32.totalorder %s21, 1
      %p107 = por %p105, %p106
      %p108 = scmp.ne.s32.totalorder %s97, %s98
      %p109 = scmp.eq.s32.totalorder %s21, 0
      %p110 = por %p108, %p109
      %p111 = scmp.ne.s32.totalorder %s97, %s98
      %p112 = scmp.eq.s32.totalorder %s22, 1
      %p113 = por %p111, %p112
      %p115 = scmp.ne.s32.totalorder %s98, %s114
      %p116 = scmp.eq.s32.totalorder %s22, 0
      %p117 = por %p115, %p116
      %p118 = scmp.le.s32.totalorder 1, %s16
      %p119 = scmp.lt.s32.totalorder %s16, 3
      %p120 = pnand %p118, %p119
      %p121 = pneg %p120
      // Predicated region
      $region9: #{tpu_custom_call.1} parent=5 // pred_check
        _
      $region10: #{tpu_custom_call.1} parent=5 // pred_check_branch
        %123 = sbr.rel (%p120) target = $region12
      $region11: #{tpu_custom_call.1} parent=5 // pred_region
        %s124 = ssub.s32 %s16, 1
        // Predicated region
        $region13: #{tpu_custom_call.1} parent=11 // pred_check
          %p125 = pneg %p63
        $region14: #{tpu_custom_call.1} parent=11 // pred_check_branch
          %127 = sbr.rel (%p125) target = $region16
        $region15: #{tpu_custom_call.1} parent=11 // pred_region
          %129 = vsyncadd [#allocation6], 0
          %s130 = sshll.u32 %s1, 4
          %s131 = int_to_ptr.hbm [resolvable:$true] %s130
          %s132 = sshll.u32 [#allocation5], 4
          %s133 = int_to_ptr.vmem [resolvable:$true] %s132
          %138 = dma.hbm_to_vmem [thread:$0]  %s131, 4096, %s133, [#allocation6], 128, 128, 8
        $region16: #{tpu_custom_call.1} parent=11 // pred_fallthru
          _
        // Predicated region
        $region17: #{tpu_custom_call.1} parent=11 // pred_check
          %p139 = pneg %p84
        $region18: #{tpu_custom_call.1} parent=11 // pred_check_branch
          %141 = sbr.rel (%p139) target = $region20
        $region19: #{tpu_custom_call.1} parent=11 // pred_region
          %143 = vsyncadd [#allocation6], 0
          %s145 = sshll.u32 %s2, 4
          %s146 = int_to_ptr.hbm [resolvable:$true] %s145
          %s147 = sshll.u32 [#allocation7], 4
          %s148 = int_to_ptr.vmem [resolvable:$true] %s147
          %150 = dma.hbm_to_vmem [thread:$0]  %s146, 128, %s148, [#allocation6]
        $region20: #{tpu_custom_call.1} parent=11 // pred_fallthru
          _
      $region12: #{tpu_custom_call.1} parent=5 // pred_fallthru
        _
      %p151 = scmp.lt.s32.totalorder %s16, 2
      // Predicated region
      $region21: #{tpu_custom_call.1} parent=5 // pred_check
        %p152 = pneg %p151
      $region22: #{tpu_custom_call.1} parent=5 // pred_check_branch
        %154 = sbr.rel (%p152) target = $region24
      $region23: #{tpu_custom_call.1} parent=5 // pred_region
        // Predicated region
        $region25: #{tpu_custom_call.1} parent=23 // pred_check
          %p155 = pneg %p36
        $region26: #{tpu_custom_call.1} parent=23 // pred_check_branch
          %157 = sbr.rel (%p155) target = $region28
        $region27: #{tpu_custom_call.1} parent=23 // pred_region
          %s158 = sand.u32 %s26, 1
          %s159 = scalar_lea.sflag [#allocation3], %s158
          %s160 = sand.u32 %s26, 1
          %s161 = smul.addr %s160, 32
          %s162 = scalar_lea.vmem [#allocation2], %s161
          %s163 = smul.u32 2, %s16
          %165 = vsyncadd %s159, 0
          %s166 = smul.addr %s163, 2
          %s167 = smul.addr %s166, 8
          %s168 = scalar_lea.hbm %s0, %s167
          %s169 = sshll.u32 %s168, 4
          %s170 = int_to_ptr.hbm [resolvable:$true] %s169
          %s171 = sshll.u32 %s162, 4
          %s172 = int_to_ptr.vmem [resolvable:$true] %s171
          %177 = dma.hbm_to_vmem [thread:$0]  %s170, 512, %s172, %s159, 256, 256, 16
        $region28: #{tpu_custom_call.1} parent=23 // pred_fallthru
          _
      $region24: #{tpu_custom_call.1} parent=5 // pred_fallthru
        _
      %p178 = scmp.le.s32.totalorder 1, %s16
      %p179 = scmp.lt.s32.totalorder %s16, 3
      %p180 = pnand %p178, %p179
      %p181 = pneg %p180
      // Predicated region
      $region29: #{tpu_custom_call.1} parent=5 // pred_check
        _
      $region30: #{tpu_custom_call.1} parent=5 // pred_check_branch
        %183 = sbr.rel (%p180) target = $region32
      $region31: #{tpu_custom_call.1} parent=5 // pred_region
        %s184 = ssub.s32 %s16, 1
        %s185 = sand.u32 %s29, 1
        %s186 = scalar_lea.sflag [#allocation3], %s185
        %s187 = sand.u32 %s29, 1
        %s188 = smul.addr %s187, 32
        %s189 = scalar_lea.vmem [#allocation2], %s188
        // Predicated region
        $region33: #{tpu_custom_call.1} parent=31 // pred_check
          %p190 = pneg %p42
        $region34: #{tpu_custom_call.1} parent=31 // pred_check_branch
          %192 = sbr.rel (%p190) target = $region36
        $region35: #{tpu_custom_call.1} parent=31 // pred_region
          %194 = dma.done %s186, 512
        $region36: #{tpu_custom_call.1} parent=31 // pred_fallthru
          _
        // Predicated region
        $region37: #{tpu_custom_call.1} parent=31 // pred_check
          %p195 = pneg %p63
        $region38: #{tpu_custom_call.1} parent=31 // pred_check_branch
          %197 = sbr.rel (%p195) target = $region40
        $region39: #{tpu_custom_call.1} parent=31 // pred_region
          %199 = dma.done [#allocation6], 4096
        $region40: #{tpu_custom_call.1} parent=31 // pred_fallthru
          _
        // Predicated region
        $region41: #{tpu_custom_call.1} parent=31 // pred_check
          %p200 = pneg %p84
        $region42: #{tpu_custom_call.1} parent=31 // pred_check_branch
          %202 = sbr.rel (%p200) target = $region44
        $region43: #{tpu_custom_call.1} parent=31 // pred_region
          %204 = dma.done [#allocation6], 128
        $region44: #{tpu_custom_call.1} parent=31 // pred_fallthru
          _
        %s205 = sand.u32 %s29, 1
        %s206 = scalar_lea.sflag [#allocation3], %s205
        %s207 = sand.u32 %s29, 1
        %s208 = smul.addr %s207, 32
        %s209 = scalar_lea.vmem [#allocation2], %s208
        %p210 = pneg %p42
        %p211 = pneg %p39
        %p212 = pneg %p63
        %p213 = pneg %p60
        %p214 = pneg %p84
        %p215 = pneg %p81
        %p216 = pneg %p110
        %p217 = pneg %p107
        %s218 = sand.u32 %s97, 1
        %s219 = scalar_lea.sflag [#allocation4], %s218
        %s220 = sand.u32 %s97, 1
        %s221 = smul.addr %s220, 16
        %s222 = scalar_lea.vmem [#allocation8], %s221
        %s223 = smul.u32 2, %s21
        %s224 = smul.u32 2, %s21
        %v225 = vld [vmem:[%s189] sm:$0xff]
        %v226 = vld [vmem:[%s189 + $0x8] sm:$0xff]
        %v227 = vld [vmem:[%s189 + $0x10] sm:$0xff]
        %v228 = vld [vmem:[%s189 + $0x18] sm:$0xff]
        %v229 = vld [vmem:[#allocation5] sm:$0xff]
        %v230 = vld [vmem:[#allocation5 + $0x8] sm:$0xff]
        %v231 = vld [vmem:[#allocation5 + $0x10] sm:$0xff]
        %v232 = vld [vmem:[#allocation5 + $0x18] sm:$0xff]
        %v233 = vld [vmem:[#allocation5 + $0x20] sm:$0xff]
        %v234 = vld [vmem:[#allocation5 + $0x28] sm:$0xff]
        %v235 = vld [vmem:[#allocation5 + $0x30] sm:$0xff]
        %v236 = vld [vmem:[#allocation5 + $0x38] sm:$0xff]
        %v237 = vld [vmem:[#allocation5 + $0x40] sm:$0xff]
        %v238 = vld [vmem:[#allocation5 + $0x48] sm:$0xff]
        %v239 = vld [vmem:[#allocation5 + $0x50] sm:$0xff]
        %v240 = vld [vmem:[#allocation5 + $0x58] sm:$0xff]
        %v241 = vld [vmem:[#allocation5 + $0x60] sm:$0xff]
        %v242 = vld [vmem:[#allocation5 + $0x68] sm:$0xff]
        %v243 = vld [vmem:[#allocation5 + $0x70] sm:$0xff]
        %v244 = vld [vmem:[#allocation5 + $0x78] sm:$0xff]
        %v245 = vld [vmem:[#allocation5 + $0x80] sm:$0xff]
        %v246 = vld [vmem:[#allocation5 + $0x88] sm:$0xff]
        %v247 = vld [vmem:[#allocation5 + $0x90] sm:$0xff]
        %v248 = vld [vmem:[#allocation5 + $0x98] sm:$0xff]
        %v249 = vld [vmem:[#allocation5 + $0xa0] sm:$0xff]
        %v250 = vld [vmem:[#allocation5 + $0xa8] sm:$0xff]
        %v251 = vld [vmem:[#allocation5 + $0xb0] sm:$0xff]
        %v252 = vld [vmem:[#allocation5 + $0xb8] sm:$0xff]
        %v253 = vld [vmem:[#allocation5 + $0xc0] sm:$0xff]
        %v254 = vld [vmem:[#allocation5 + $0xc8] sm:$0xff]
        %v255 = vld [vmem:[#allocation5 + $0xd0] sm:$0xff]
        %v256 = vld [vmem:[#allocation5 + $0xd8] sm:$0xff]
        %v257 = vld [vmem:[#allocation5 + $0xe0] sm:$0xff]
        %v258 = vld [vmem:[#allocation5 + $0xe8] sm:$0xff]
        %v259 = vld [vmem:[#allocation5 + $0xf0] sm:$0xff]
        %v260 = vld [vmem:[#allocation5 + $0xf8] sm:$0xff]
        %v261 = vld [vmem:[#allocation7] sm:$0xff]
        %v262 = vperm.slane %v261, 0
        %263 = vmatpush.msra.mxu0 %v244
        %264 = vmatpush.msra.mxu0 %v243
        %265 = vmatpush.msra.mxu0 %v242
        %266 = vmatpush.msra.mxu0 %v241
        %267 = vmatpush.msra.mxu0 %v240
        %268 = vmatpush.msra.mxu0 %v239
        %269 = vmatpush.msra.mxu0 %v238
        %270 = vmatpush.msra.mxu0 %v237
        %271 = vmatpush.msra.mxu0 %v236
        %272 = vmatpush.msra.mxu0 %v235
        %273 = vmatpush.msra.mxu0 %v234
        %274 = vmatpush.msra.mxu0 %v233
        %275 = vmatpush.msra.mxu0 %v232
        %276 = vmatpush.msra.mxu0 %v231
        %277 = vmatpush.msra.mxu0 %v230
        %278 = vmatpush.msra.mxu0 %v229
        %279 = vmatmul.f32.gmra.mxu0 %v225
        %v280 = vpop.f32.mrf.mxu0
        %v281 = vadd.f32 %v262, %v280
        %282 = vmatmul.f32.gmra.mxu0 %v227
        %v283 = vpop.f32.mrf.mxu0
        %v284 = vadd.f32 %v262, %v283
        %285 = vdwg.mxu0
        %286 = vmatpush.msra.mxu0 %v260
        %287 = vmatpush.msra.mxu0 %v259
        %288 = vmatpush.msra.mxu0 %v258
        %289 = vmatpush.msra.mxu0 %v257
        %290 = vmatpush.msra.mxu0 %v256
        %291 = vmatpush.msra.mxu0 %v255
        %292 = vmatpush.msra.mxu0 %v254
        %293 = vmatpush.msra.mxu0 %v253
        %294 = vmatpush.msra.mxu0 %v252
        %295 = vmatpush.msra.mxu0 %v251
        %296 = vmatpush.msra.mxu0 %v250
        %297 = vmatpush.msra.mxu0 %v249
        %298 = vmatpush.msra.mxu0 %v248
        %299 = vmatpush.msra.mxu0 %v247
        %300 = vmatpush.msra.mxu0 %v246
        %301 = vmatpush.msra.mxu0 %v245
        %302 = vmatmul.f32.gmra.mxu0 %v226
        %v303 = vpop.f32.mrf.mxu0
        %v304 = vadd.f32 %v281, %v303
        %305 = vmatmul.f32.gmra.mxu0 %v228
        %v306 = vpop.f32.mrf.mxu0
        %v307 = vadd.f32 %v284, %v306
        %308 = vdwg.mxu0
        %309 = vadd.xlane.f32.xlu0 %v304
        %v310 = vpop.xlane.xlu0 %309
        %311 = vadd.xlane.f32.xlu0 %v307
        %v312 = vpop.xlane.xlu0 %311
        %v313 = vmul.f32 %v310, 0.03125
        %v314 = vmul.f32 %v312, 0.03125
        %v315 = vsub.f32 %v304, %v313
        %v316 = vsub.f32 %v307, %v314
        %v317 = vperm.slane %v261, 3
        %v318 = vmul.f32 %v315, %v317
        %v319 = vmul.f32 %v316, %v317
        %v320 = vmul.f32 %v318, %v318
        %v321 = vmul.f32 %v319, %v319
        %322 = vadd.xlane.f32.xlu0 %v320
        %v323 = vpop.xlane.xlu0 %322
        %324 = vadd.xlane.f32.xlu0 %v321
        %v325 = vpop.xlane.xlu0 %324
        %v326 = vmul.f32 %v323, 0.03125
        %v327 = vmul.f32 %v325, 0.03125
        %v328 = vadd.f32 %v326, 1e-05
        %v329 = vadd.f32 %v327, 1e-05
        %v330 = vrsqrt.pop %v328
        %v331 = vmul.f32 %v330, %v328
        %v332 = vmul.f32 %v331, %v330
        %v333 = vmul.f32 0.5, %v332
        %v334 = vsub.f32 1.5, %v333
        %v335 = vmul.f32 %v330, %v334
        %vm336 = vweird.f32 %v328
        %vm337 = vweird.f32 %v330
        %vm338 = vmor %vm336, %vm337
        %v339 = vsel %vm338, %v330, %v335
        %v340 = vrsqrt.pop %v329
        %v341 = vmul.f32 %v340, %v329
        %v342 = vmul.f32 %v341, %v340
        %v343 = vmul.f32 0.5, %v342
        %v344 = vsub.f32 1.5, %v343
        %v345 = vmul.f32 %v340, %v344
        %vm346 = vweird.f32 %v329
        %vm347 = vweird.f32 %v340
        %vm348 = vmor %vm346, %vm347
        %v349 = vsel %vm348, %v340, %v345
        %v350 = vperm.slane %v261, 1
        %v351 = vmul.f32 %v350, %v339
        %v352 = vmul.f32 %v350, %v349
        %v353 = vmul.f32 %v318, %v351
        %v354 = vmul.f32 %v319, %v352
        %v355 = vperm.slane %v261, 2
        %v356 = vadd.f32 %v353, %v355
        %v357 = vadd.f32 %v354, %v355
        %358 = vst [vmem:[%s222] sm:$0xff] %v356
        %359 = vst [vmem:[%s222 + $0x8] sm:$0xff] %v357
        %s360 = sand.u32 %s97, 1
        %s361 = scalar_lea.sflag [#allocation4], %s360
        %s362 = sand.u32 %s97, 1
        %s363 = smul.addr %s362, 16
        %s364 = scalar_lea.vmem [#allocation8], %s363
        // Predicated region
        $region45: #{tpu_custom_call.1} parent=31 // pred_check
          %p365 = pneg %p107
        $region46: #{tpu_custom_call.1} parent=31 // pred_check_branch
          %367 = sbr.rel (%p365) target = $region48
        $region47: #{tpu_custom_call.1} parent=31 // pred_region
          %s368 = smul.u32 2, %s21
          %370 = vsyncadd %s361, 0
          %s371 = smul.addr %s368, 8
          %s372 = scalar_lea.hbm %s3, %s371
          %s373 = sshll.u32 %s364, 4
          %s374 = int_to_ptr.vmem [resolvable:$true] %s373
          %s375 = sshll.u32 %s372, 4
          %s376 = int_to_ptr.hbm [resolvable:$true] %s375
          %381 = dma.vmem_to_hbm [thread:$0]  %s374, 256, %s376, %s361, 128, 128, 8
        $region48: #{tpu_custom_call.1} parent=31 // pred_fallthru
          _
      $region32: #{tpu_custom_call.1} parent=5 // pred_fallthru
        _
      %p382 = scmp.le.s32.totalorder 2, %s16
      // Predicated region
      $region49: #{tpu_custom_call.1} parent=5 // pred_check
        %p383 = pneg %p382
      $region50: #{tpu_custom_call.1} parent=5 // pred_check_branch
        %385 = sbr.rel (%p383) target = $region52
      $region51: #{tpu_custom_call.1} parent=5 // pred_region
        %s386 = ssub.s32 %s16, 2
        // Predicated region
        $region53: #{tpu_custom_call.1} parent=51 // pred_check
          %p387 = pneg %p113
        $region54: #{tpu_custom_call.1} parent=51 // pred_check_branch
          %389 = sbr.rel (%p387) target = $region56
        $region55: #{tpu_custom_call.1} parent=51 // pred_region
          %s390 = sand.u32 %s98, 1
          %s391 = scalar_lea.sflag [#allocation4], %s390
          %s392 = sand.u32 %s98, 1
          %s393 = smul.addr %s392, 16
          %s394 = scalar_lea.vmem [#allocation8], %s393
          %396 = dma.done %s391, 256
        $region56: #{tpu_custom_call.1} parent=51 // pred_fallthru
          _
      $region52: #{tpu_custom_call.1} parent=5 // pred_fallthru
        _
    $region6: #{tpu_custom_call.1} parent=1 // loop_footer
      %s20 = sadd.s32 1, %s16
    $region7: #{tpu_custom_call.1} parent=1 // loop_footer_branch
      %15 = sbr.rel target = $region3
    $region8: #{tpu_custom_call.1} parent=1 // loop_exit
      _
    %397 = vsyncpa [#allocation3], 1
    %s398 = scalar_lea.sflag [#allocation3], 1
    %399 = vsyncpa %s398, 1
    %400 = vsyncpa [#allocation6], 1
    %401 = vsyncpa [#allocation4], 1
    %s402 = scalar_lea.sflag [#allocation4], 1
    %403 = vsyncpa %s402, 1

</llo_original>
